<compile_context>
chip_gen: v6e
topology: v6e:2x2x1
jax: 0.10.0
libtpu: 0.0.40
codegen_flags: <defaults>
</compile_context>

<pallas_src>
import numpy as np
import jax
import jax.numpy as jnp
from jax import lax
from jax.experimental import pallas as pl
from jax.experimental.pallas import tpu as pltpu


def _round_up(a, b):
    return -(-a // b) * b


def _conv_bn_relu_kernel(xt_ref, w_ref, shift_ref, o_ref):
    # xt_ref: (K, tile_s) bf16, w_ref: (Cout, K) bf16 (BN scale folded in),
    # shift_ref: (Cout, 1) f32, o_ref: (Cout, tile_s) f32.
    acc = jnp.dot(w_ref[...], xt_ref[...], preferred_element_type=jnp.float32)
    o_ref[...] = jnp.maximum(acc + shift_ref[...], 0.0).astype(o_ref.dtype)


def _choose_tile_s(S, N, K, Cout, in_bytes, out_bytes,
                   vmem_budget=32 * 1024 * 1024, max_tile=8192):
    # Double-buffered input + output bytes per lane of the tile.
    per_lane = 2 * (K * in_bytes + Cout * out_bytes)
    cap = max(128, (vmem_budget // per_lane) // 128 * 128)
    s128 = _round_up(S, 128)
    tile = min(cap, s128, max_tile)
    # Keep at least 2 grid steps total so v7x's 2 TensorCores both get work.
    if N * _round_up(s128, tile) // tile < 2 and tile > 128:
        tile = max(128, (tile // 2) // 128 * 128)
    return tile


def gating_block_forward(x, conv_w, conv_b, bn_gamma, bn_beta, bn_mean, bn_var,
                         eps=1e-5, compute_dtype=jnp.bfloat16):
    """x: (N, Cin, D, H, W) f32. conv_w: (Cout, Cin, kd, kh, kw). Returns NCDHW f32."""
    N, Cin, D, H, W = x.shape
    Cout, _, kd, kh, kw = conv_w.shape
    Do, Ho, Wo = D - kd + 1, H - kh + 1, W - kw + 1   # padding=0 ("VALID")
    S = Do * Ho * Wo
    K = Cin * kd * kh * kw

    # Fold conv bias + eval-mode BatchNorm into the weight (scale) and a shift.
    inv_std = 1.0 / jnp.sqrt(bn_var.astype(jnp.float32) + eps)
    ch_scale = (bn_gamma * inv_std).astype(jnp.float32)                 # (Cout,)
    w_mat = conv_w.reshape(Cout, K).astype(jnp.float32) * ch_scale[:, None]
    shift = (bn_beta + (conv_b - bn_mean) * bn_gamma * inv_std
             ).reshape(Cout, 1).astype(jnp.float32)

    if kd == kh == kw == 1:
        # 1x1x1 conv: the NCDHW layout is already (N, K=Cin, S) -- pure reshape.
        xt = x.reshape(N, Cin, S)
    else:
        # Fallback: transposed im2col, rows ordered (Cin, kd, kh, kw) to match
        # PyTorch's Conv3d weight flattening.
        slices = []
        for dz in range(kd):
            for dy in range(kh):
                for dx in range(kw):
                    slices.append(x[:, :, dz:dz + Do, dy:dy + Ho, dx:dx + Wo])
        xt = jnp.stack(slices, axis=2).reshape(N, K, S)   # (N, Cin, taps, ...) -> (N, K, S)

    xt = xt.astype(compute_dtype)
    w_mat = w_mat.astype(compute_dtype)

    in_bytes = jnp.dtype(compute_dtype).itemsize
    tile_s = _choose_tile_s(S, N, K, Cout, in_bytes, 4)
    Sp = _round_up(S, tile_s)
    if Sp != S:
        xt = jnp.pad(xt, ((0, 0), (0, 0), (0, Sp - S)))

    grid = (N, Sp // tile_s)
    out = pl.pallas_call(
        _conv_bn_relu_kernel,
        out_shape=jax.ShapeDtypeStruct((N, Cout, Sp), jnp.float32),
        grid=grid,
        in_specs=[
            # Lane-dense activation tile: (K, tile_s), batch dim squeezed.
            pl.BlockSpec((None, K, tile_s), lambda n, s: (n, 0, s)),
            # Folded (scaled) weight, resident across the grid.
            pl.BlockSpec((Cout, K), lambda n, s: (0, 0)),
            # Per-channel shift column (bias + BN), resident.
            pl.BlockSpec((Cout, 1), lambda n, s: (0, 0)),
        ],
        out_specs=pl.BlockSpec((None, Cout, tile_s), lambda n, s: (n, 0, s)),
        compiler_params=pltpu.CompilerParams(
            dimension_semantics=("parallel", "parallel"),
            vmem_limit_bytes=48 * 1024 * 1024),
    )(xt, w_mat, shift)

    # Slice off lane padding; reshape back to NCDHW with no transpose.
    return out[:, :, :S].reshape(N, Cout, Do, Ho, Wo)


def _reference(x, conv_w, conv_b, bn_gamma, bn_beta, bn_mean, bn_var, eps=1e-5):
    y = lax.conv_general_dilated(
        x, conv_w, window_strides=(1, 1, 1), padding="VALID",
        dimension_numbers=("NCDHW", "OIDHW", "NCDHW"))
    y = y + conv_b.reshape(1, -1, 1, 1, 1)
    y = (y - bn_mean.reshape(1, -1, 1, 1, 1)) / jnp.sqrt(
        bn_var.reshape(1, -1, 1, 1, 1) + eps)
    y = y * bn_gamma.reshape(1, -1, 1, 1, 1) + bn_beta.reshape(1, -1, 1, 1, 1)
    return jnp.maximum(y, 0.0)


def _run_case(key, N, Cin, Cout, ks, D, H, W):
    k_x, k_w, k_b, k_g, k_be = jax.random.split(key, 5)
    x = jax.random.normal(k_x, (N, Cin, D, H, W), dtype=jnp.float32)
    conv_w = jax.random.normal(k_w, (Cout, Cin, ks, ks, ks),
                               dtype=jnp.float32) * 0.1
    conv_b = jax.random.normal(k_b, (Cout,), dtype=jnp.float32) * 0.1
    bn_gamma = 1.0 + 0.1 * jax.random.normal(k_g, (Cout,), dtype=jnp.float32)
    bn_beta = 0.1 * jax.random.normal(k_be, (Cout,), dtype=jnp.float32)
    bn_mean = jnp.zeros((Cout,), dtype=jnp.float32)   # fresh BN running stats
    bn_var = jnp.ones((Cout,), dtype=jnp.float32)

    out = gating_block_forward(x, conv_w, conv_b, bn_gamma, bn_beta,
                               bn_mean, bn_var)
    out = jax.block_until_ready(out)

    ref = _reference(x, conv_w, conv_b, bn_gamma, bn_beta, bn_mean, bn_var)
    # bf16 matmul operands with f32 accumulation -> loosen tolerance vs f32 ref.
    np.testing.assert_allclose(np.asarray(out), np.asarray(ref),
                               rtol=2e-2, atol=2e-2)
    assert out.shape == (N, Cout, D - ks + 1, H - ks + 1, W - ks + 1)


if __name__ == "__main__":
    key = jax.random.PRNGKey(0)
    k1, k2 = jax.random.split(key)
    # gating_block as used in attenunet3d: 1x1x1 conv + BN + ReLU (small shapes).
    _run_case(k1, N=2, Cin=16, Cout=16, ks=1, D=8, H=8, W=8)
    # general kernel_size fallback path (transposed im2col, same Pallas kernel).
    _run_case(k2, N=2, Cin=4, Cout=8, ks=2, D=8, H=8, W=8)
    print("KERNEL_OK")
</pallas_src>

<mosaic_0001>
module attributes {stable_mosaic.version = 11 : i64} {
  func.func @_conv_bn_relu_kernel(%arg0: i32, %arg1: i32, %arg2: memref<1x16x512xbf16, #tpu.memory_space<vmem>>, %arg3: memref<16x16xbf16, #tpu.memory_space<vmem>>, %arg4: memref<16x1xf32, #tpu.memory_space<vmem>>, %arg5: memref<1x16x512xf32, #tpu.memory_space<vmem>>) attributes {dimension_semantics = [#tpu.dimension_semantics<parallel>, #tpu.dimension_semantics<parallel>], iteration_bounds = array<i64: 2, 1>, scalar_prefetch = 0 : i64, scratch_operands = 0 : i64, tpu.core_type = #tpu.core_type<tc>, window_params = [{transform_indices = @transform_0, window_bounds = array<i64: 1, 16, 512>}, {pipeline_mode = #tpu.pipeline_mode<synchronous>, transform_indices = @transform_1, window_bounds = array<i64: 16, 16>}, {pipeline_mode = #tpu.pipeline_mode<synchronous>, transform_indices = @transform_2, window_bounds = array<i64: 16, 1>}, {transform_indices = @transform_3, window_bounds = array<i64: 1, 16, 512>}]} {
    %c0 = arith.constant 0 : index
    %c0_0 = arith.constant 0 : index
    %0 = vector.load %arg3[%c0, %c0_0] : memref<16x16xbf16, #tpu.memory_space<vmem>>, vector<16x16xbf16>
    %c0_1 = arith.constant 0 : index
    %c0_2 = arith.constant 0 : index
    %c0_3 = arith.constant 0 : index
    %1 = vector.load %arg2[%c0_1, %c0_2, %c0_3] : memref<1x16x512xbf16, #tpu.memory_space<vmem>>, vector<1x16x512xbf16>
    %2 = vector.shape_cast %1 : vector<1x16x512xbf16> to vector<16x512xbf16>
    %cst = arith.constant dense<0.000000e+00> : vector<16x512xf32>
    %3 = tpu.matmul %0, %2, %cst {dimension_numbers = #tpu.dot_dimension_numbers<[1], [0], [0], [1], [0, 0, 1, 1], [], []>} : vector<16x16xbf16>, vector<16x512xbf16>, vector<16x512xf32> -> vector<16x512xf32>
    %c0_4 = arith.constant 0 : index
    %c0_5 = arith.constant 0 : index
    %4 = vector.load %arg4[%c0_4, %c0_5] : memref<16x1xf32, #tpu.memory_space<vmem>>, vector<16x1xf32>
    %5 = vector.broadcast %4 : vector<16x1xf32> to vector<16x512xf32>
    %6 = arith.addf %3, %5 : vector<16x512xf32>
    %cst_6 = arith.constant 0.000000e+00 : f32
    %7 = vector.broadcast %cst_6 : f32 to vector<16x512xf32>
    %8 = arith.maximumf %6, %7 : vector<16x512xf32>
    %c0_7 = arith.constant 0 : index
    %c0_8 = arith.constant 0 : index
    %c0_9 = arith.constant 0 : index
    %9 = vector.load %arg5[%c0_7, %c0_8, %c0_9] : memref<1x16x512xf32, #tpu.memory_space<vmem>>, vector<1x16x512xf32>
    %10 = vector.shape_cast %9 : vector<1x16x512xf32> to vector<16x512xf32>
    %11 = vector.shape_cast %8 : vector<16x512xf32> to vector<1x16x512xf32>
    tpu.vector_store %arg5[%c0_7, %c0_8, %c0_9], %11 {strides = array<i32>} : memref<1x16x512xf32, #tpu.memory_space<vmem>>, vector<1x16x512xf32>,
    return
  }
  func.func @transform_0(%arg0: i32, %arg1: i32) -> (i32, i32, i32) {
    %c0_i32 = arith.constant 0 : i32
    %c0_i32_0 = arith.constant 0 : i32
    return %arg0, %c0_i32, %arg1 : i32, i32, i32
  }
  func.func @transform_1(%arg0: i32, %arg1: i32) -> (i32, i32) {
    %c0_i32 = arith.constant 0 : i32
    %c0_i32_0 = arith.constant 0 : i32
    %c0_i32_1 = arith.constant 0 : i32
    return %c0_i32, %c0_i32_0 : i32, i32
  }
  func.func @transform_2(%arg0: i32, %arg1: i32) -> (i32, i32) {
    %c0_i32 = arith.constant 0 : i32
    %c0_i32_0 = arith.constant 0 : i32
    %c0_i32_1 = arith.constant 0 : i32
    return %c0_i32, %c0_i32_0 : i32, i32
  }
  func.func @transform_3(%arg0: i32, %arg1: i32) -> (i32, i32, i32) {
    %c0_i32 = arith.constant 0 : i32
    %c0_i32_0 = arith.constant 0 : i32
    return %arg0, %c0_i32, %arg1 : i32, i32, i32
  }
}

</mosaic_0001>

<llo_original>
// kernel: tpu_custom_call.1
$region0: #{tpu_custom_call.1}
  #allocation0 [shape = 'u32[]', space=smem, size = 0x4, offset = 0x4, fixed_abs, tag = 'smem constant byte address 0x4 - core index']
  #allocation1 [shape = 'u32[144,128]{1,0:T(1,128)}', space=vmem, size = 0x12000, scoped, tag = 'internal scratch']
  %s0 = inlined_call_operand.hbm [shape: bf16[2,16,512], index: 0, kind: input, shape index: {}]
  %s1 = inlined_call_operand.vmem [shape: bf16[16,16], index: 1, kind: input, shape index: {}]
  %s2 = inlined_call_operand.vmem [shape: f32[16,1], index: 2, kind: input, shape index: {}]
  %s3 = inlined_call_operand.hbm [shape: f32[2,16,512], index: 3, kind: output, shape index: {}]
  %s4 = sld [smem:[#allocation0]]
  $region49: #{tpu_custom_call.1} parent=0
    _
  %s6 = ssub.s32 1, %s4
  %s7 = scalar_select 0, %s6, %s4
  $region1: #{tpu_custom_call.1} parent=0
    #allocation2 [shape = 'u8[32768]{0}', space=vmem, size = 0x8000, scoped, tag = 'input window, operand 0']
    #allocation3 [shape = 's32[2]{0}', space=sflag, size = 0x8, scoped, tag = 'scoped memory for tpu_custom_call.1']
    #allocation4 [shape = 's32[2]{0}', space=sflag, size = 0x8, scoped, tag = 'scoped memory for tpu_custom_call.1']
    #allocation5 [shape = 'u8[65536]{0}', space=vmem, size = 0x10000, scoped, tag = 'output window, operand 0']
    %8 = vsyncpa [#allocation3], 0
    %s9 = scalar_lea.sflag [#allocation3], 1
    %10 = vsyncpa %s9, 0
    %11 = vsyncpa [#allocation4], 0
    %s12 = scalar_lea.sflag [#allocation4], 1
    %13 = vsyncpa %s12, 0
    loop: start=0, step=1, limit=4
    $region2: #{tpu_custom_call.1} parent=1 // loop_pre_header
      _
    $region3: #{tpu_custom_call.1} parent=1 // loop_header
      %s15 = sphi 0, %s19
      %p16 = scmp.ge.s32.totalorder %s15, 4
      %s22 = sphi 0, %s34
      %s23 = sphi 0, %s30
      %s24 = sphi 0, %s22
      %s25 = sphi 0, %s23
      %s26 = sphi 0, %s24
      %s27 = sphi 0, %s25
      %s39 = sphi 0, %s41
      %s42 = sphi 0, %s39
      %s43 = sphi 0, %s42
      %s59 = sphi 0, %s43
      %s63 = sphi 0, %s63
      %s65 = sphi 0, %s63
      %s66 = sphi 0, %s65
      %s80 = sphi 0, %s66
      %s84 = sphi 0, %s84
      %s86 = sphi 0, %s84
      %s87 = sphi 0, %s86
      %s101 = sphi 0, %s87
      %s109 = sphi 0, %s111
      %s112 = sphi 0, %s109
      %s113 = sphi 0, %s112
      %s129 = sphi 0, %s113
    $region4: #{tpu_custom_call.1} parent=1 // loop_header_branch
      %18 = sbr.rel (%p16) target = $region8
    $region5: #{tpu_custom_call.1} parent=1 // loop_body
      %s20 = ssub.s32 %s15, 1
      %s21 = ssub.s32 %s15, 2
      %s28 = sadd.s32 1, %s23
      %p29 = scmp.ge.s32.totalorder %s28, 1
      %s30 = scalar_select %p29, 0, %s28
      %s31 = sadd.s32 1, %s22
      %s32 = scalar_select %p29, %s31, %s22
      %p33 = scmp.ge.s32.totalorder %s32, 2
      %s34 = scalar_select %p33, 0, %s32
      %s35 = ssub.s32 %s22, %s34
      %s36 = ssub.s32 %s23, %s30
      %s37 = sor.u32 %s35, %s36
      %p38 = scmp.eq.s32.totalorder %s37, 0
      %s40 = sadd.s32 %s39, 1
      %s41 = scalar_select %p38, %s39, %s40
      %p44 = pneg %p38
      %p45 = scmp.eq.s32.totalorder %s15, 1
      %p46 = por %p44, %p45
      %p47 = scmp.ne.s32.totalorder %s39, %s42
      %p48 = scmp.eq.s32.totalorder %s15, 0
      %p49 = por %p47, %p48
      %p50 = scmp.ne.s32.totalorder %s39, %s42
      %p51 = scmp.eq.s32.totalorder %s20, 1
      %p52 = por %p50, %p51
      %p53 = scmp.ne.s32.totalorder %s42, %s43
      %p54 = scmp.eq.s32.totalorder %s20, 0
      %p55 = por %p53, %p54
      %p56 = scmp.ne.s32.totalorder %s42, %s43
      %p57 = scmp.eq.s32.totalorder %s21, 1
      %p58 = por %p56, %p57
      %p60 = scmp.ne.s32.totalorder %s43, %s59
      %p61 = scmp.eq.s32.totalorder %s21, 0
      %p62 = por %p60, %p61
      %s64 = sadd.s32 %s63, 1
      %p67 = scmp.eq.s32.totalorder %s15, 1
      %p68 = scmp.ne.s32.totalorder %s63, %s65
      %p69 = scmp.eq.s32.totalorder %s15, 0
      %p70 = por %p68, %p69
      %p71 = scmp.ne.s32.totalorder %s63, %s65
      %p72 = scmp.eq.s32.totalorder %s20, 1
      %p73 = por %p71, %p72
      %p74 = scmp.ne.s32.totalorder %s65, %s66
      %p75 = scmp.eq.s32.totalorder %s20, 0
      %p76 = por %p74, %p75
      %p77 = scmp.ne.s32.totalorder %s65, %s66
      %p78 = scmp.eq.s32.totalorder %s21, 1
      %p79 = por %p77, %p78
      %p81 = scmp.ne.s32.totalorder %s66, %s80
      %p82 = scmp.eq.s32.totalorder %s21, 0
      %p83 = por %p81, %p82
      %s85 = sadd.s32 %s84, 1
      %p88 = scmp.eq.s32.totalorder %s15, 1
      %p89 = scmp.ne.s32.totalorder %s84, %s86
      %p90 = scmp.eq.s32.totalorder %s15, 0
      %p91 = por %p89, %p90
      %p92 = scmp.ne.s32.totalorder %s84, %s86
      %p93 = scmp.eq.s32.totalorder %s20, 1
      %p94 = por %p92, %p93
      %p95 = scmp.ne.s32.totalorder %s86, %s87
      %p96 = scmp.eq.s32.totalorder %s20, 0
      %p97 = por %p95, %p96
      %p98 = scmp.ne.s32.totalorder %s86, %s87
      %p99 = scmp.eq.s32.totalorder %s21, 1
      %p100 = por %p98, %p99
      %p102 = scmp.ne.s32.totalorder %s87, %s101
      %p103 = scmp.eq.s32.totalorder %s21, 0
      %p104 = por %p102, %p103
      %s105 = ssub.s32 %s22, %s34
      %s106 = ssub.s32 %s23, %s30
      %s107 = sor.u32 %s105, %s106
      %p108 = scmp.eq.s32.totalorder %s107, 0
      %s110 = sadd.s32 %s109, 1
      %s111 = scalar_select %p108, %s109, %s110
      %p114 = pneg %p108
      %p115 = scmp.eq.s32.totalorder %s15, 1
      %p116 = por %p114, %p115
      %p117 = scmp.ne.s32.totalorder %s109, %s112
      %p118 = scmp.eq.s32.totalorder %s15, 0
      %p119 = por %p117, %p118
      %p120 = scmp.ne.s32.totalorder %s109, %s112
      %p121 = scmp.eq.s32.totalorder %s20, 1
      %p122 = por %p120, %p121
      %p123 = scmp.ne.s32.totalorder %s112, %s113
      %p124 = scmp.eq.s32.totalorder %s20, 0
      %p125 = por %p123, %p124
      %p126 = scmp.ne.s32.totalorder %s112, %s113
      %p127 = scmp.eq.s32.totalorder %s21, 1
      %p128 = por %p126, %p127
      %p130 = scmp.ne.s32.totalorder %s113, %s129
      %p131 = scmp.eq.s32.totalorder %s21, 0
      %p132 = por %p130, %p131
      %p133 = scmp.le.s32.totalorder 1, %s15
      %p134 = scmp.lt.s32.totalorder %s15, 3
      %p135 = pnand %p133, %p134
      %p136 = pneg %p135
      // Predicated region
      $region9: #{tpu_custom_call.1} parent=5 // pred_check
        _
      $region10: #{tpu_custom_call.1} parent=5 // pred_check_branch
        %138 = sbr.rel (%p135) target = $region12
      $region11: #{tpu_custom_call.1} parent=5 // pred_region
        %s139 = ssub.s32 %s15, 1
        // Predicated region
        $region13: #{tpu_custom_call.1} parent=11 // pred_check
          %p140 = pneg %p76
        $region14: #{tpu_custom_call.1} parent=11 // pred_check_branch
          %142 = sbr.rel (%p140) target = $region16
        $region15: #{tpu_custom_call.1} parent=11 // pred_region
          _
        $region16: #{tpu_custom_call.1} parent=11 // pred_fallthru
          _
        // Predicated region
        $region17: #{tpu_custom_call.1} parent=11 // pred_check
          %p143 = pneg %p97
        $region18: #{tpu_custom_call.1} parent=11 // pred_check_branch
          %145 = sbr.rel (%p143) target = $region20
        $region19: #{tpu_custom_call.1} parent=11 // pred_region
          _
        $region20: #{tpu_custom_call.1} parent=11 // pred_fallthru
          _
      $region12: #{tpu_custom_call.1} parent=5 // pred_fallthru
        _
      %p146 = scmp.lt.s32.totalorder %s15, 2
      // Predicated region
      $region21: #{tpu_custom_call.1} parent=5 // pred_check
        %p147 = pneg %p146
      $region22: #{tpu_custom_call.1} parent=5 // pred_check_branch
        %149 = sbr.rel (%p147) target = $region24
      $region23: #{tpu_custom_call.1} parent=5 // pred_region
        // Predicated region
        $region25: #{tpu_custom_call.1} parent=23 // pred_check
          %p150 = pneg %p49
        $region26: #{tpu_custom_call.1} parent=23 // pred_check_branch
          %152 = sbr.rel (%p150) target = $region28
        $region27: #{tpu_custom_call.1} parent=23 // pred_region
          %s153 = sand.u32 %s39, 1
          %s154 = scalar_lea.sflag [#allocation3], %s153
          %s155 = sand.u32 %s39, 1
          %s156 = smul.addr %s155, 32
          %s157 = scalar_lea.vmem [#allocation2], %s156
          %s158 = smul.u32 4, %s23
          %s160 = ssub.s32 512, 512
          %161 = vsyncadd %s154, %s160
          %s162 = smul.addr %s22, 8
          %s163 = sadd.s32 %s158, %s162
          %s164 = smul.addr %s163, 64
          %s165 = scalar_lea.hbm %s0, %s164
          %s166 = sshll.u32 %s157, 4
          %s167 = int_to_ptr.vmem [resolvable:$true] %s166
          %172 = dma.hbm_to_vmem [thread:$0]  %s165, 512, %s167, %s154, 256, 256, 16
        $region28: #{tpu_custom_call.1} parent=23 // pred_fallthru
          _
      $region24: #{tpu_custom_call.1} parent=5 // pred_fallthru
        _
      %p173 = scmp.le.s32.totalorder 1, %s15
      %p174 = scmp.lt.s32.totalorder %s15, 3
      %p175 = pnand %p173, %p174
      %p176 = pneg %p175
      // Predicated region
      $region29: #{tpu_custom_call.1} parent=5 // pred_check
        _
      $region30: #{tpu_custom_call.1} parent=5 // pred_check_branch
        %178 = sbr.rel (%p175) target = $region32
      $region31: #{tpu_custom_call.1} parent=5 // pred_region
        %s179 = ssub.s32 %s15, 1
        %s180 = sand.u32 %s42, 1
        %s181 = scalar_lea.sflag [#allocation3], %s180
        %s182 = sand.u32 %s42, 1
        %s183 = smul.addr %s182, 32
        %s184 = scalar_lea.vmem [#allocation2], %s183
        // Predicated region
        $region33: #{tpu_custom_call.1} parent=31 // pred_check
          %p185 = pneg %p55
        $region34: #{tpu_custom_call.1} parent=31 // pred_check_branch
          %187 = sbr.rel (%p185) target = $region36
        $region35: #{tpu_custom_call.1} parent=31 // pred_region
          %188 = dma.done %s181, 512
        $region36: #{tpu_custom_call.1} parent=31 // pred_fallthru
          _
        %s189 = sand.u32 %s42, 1
        %s190 = scalar_lea.sflag [#allocation3], %s189
        %s191 = sand.u32 %s42, 1
        %s192 = smul.addr %s191, 32
        %s193 = scalar_lea.vmem [#allocation2], %s192
        %p194 = pneg %p55
        %p195 = pneg %p52
        %p196 = pneg %p76
        %p197 = pneg %p73
        %p198 = pneg %p97
        %p199 = pneg %p94
        %p200 = pneg %p125
        %p201 = pneg %p122
        %s202 = sand.u32 %s112, 1
        %s203 = scalar_lea.sflag [#allocation4], %s202
        %s204 = sand.u32 %s112, 1
        %s205 = smul.addr %s204, 64
        %s206 = scalar_lea.vmem [#allocation5], %s205
        %s207 = smul.u32 4, %s25
        %s208 = smul.u32 4, %s25
        %v210 = vld [vmem:[%s1] sm:$0xf]
        %v211 = vld [vmem:[%s1 + $0x4] sm:$0xf]
        %v212 = vld [vmem:[%s184] sm:$0xff]
        %v213 = vld [vmem:[%s184 + $0x8] sm:$0xff]
        %v214 = vld [vmem:[%s184 + $0x10] sm:$0xff]
        %v215 = vld [vmem:[%s184 + $0x18] sm:$0xff]
        %v216 = vld [vmem:[%s2] sm:$0xff]
        %v217 = vld [vmem:[%s2 + $0x8] sm:$0xff]
        %219 = vset.pattern.permute.xlu0 0
        %220 = vperm.xlu0 %219, %v216
        %v221 = vpop.permute.xlu0 %220
        %224 = vset.pattern.permute.xlu0 0
        %225 = vperm.xlu0 %224, %v217
        %v226 = vpop.permute.xlu0 %225
        %v230 = vunpack.c.l.b16 %v210
        %v231 = vunpack.c.l.b16 %v211
        %v232 = vpack.c.b16 %v231, %v230
        %v237 = vunpack.c.l.b16 %v212
        %v238 = vunpack.c.h.b16 %v212
        %v239 = vunpack.c.l.b16 %v213
        %v240 = vunpack.c.h.b16 %v213
        %v241 = vunpack.c.l.b16 %v214
        %v242 = vunpack.c.h.b16 %v214
        %v243 = vunpack.c.l.b16 %v215
        %v244 = vunpack.c.h.b16 %v215
        %v245 = vpack.c.b16 %v241, %v237
        %v246 = vpack.c.b16 %v242, %v238
        %v247 = vpack.c.b16 %v243, %v239
        %v248 = vpack.c.b16 %v244, %v240
        %vm253 = vcmask 130048
        %v255 = vsel %vm253, %v232, 0
        %257 = vmatprep.subr.bf16.mxu0 0
        %258 = vmatpush1.bf16.msra.mxu0 0
        %259 = vmatprep.subr.bf16.mxu0 0
        %260 = vmatpush1.bf16.msra.mxu0 0
        %261 = vmatprep.subr.bf16.mxu0 0
        %262 = vmatpush1.bf16.msra.mxu0 0
        %263 = vmatprep.subr.bf16.mxu0 0
        %264 = vmatpush1.bf16.msra.mxu0 0
        %265 = vmatprep.subr.bf16.mxu0 0
        %266 = vmatpush1.bf16.msra.mxu0 0
        %267 = vmatprep.subr.bf16.mxu0 0
        %268 = vmatpush1.bf16.msra.mxu0 0
        %269 = vmatprep.subr.bf16.mxu0 0
        %270 = vmatpush1.bf16.msra.mxu0 0
        %271 = vmatprep.subr.bf16.mxu0 %v246
        %272 = vmatpush1.bf16.msra.mxu0 %v245
        %273 = vmatprep.subr.bf16.mxu0 0
        %274 = vmatpush2.bf16.msra.mxu0 0
        %275 = vmatprep.subr.bf16.mxu0 0
        %276 = vmatpush2.bf16.msra.mxu0 0
        %277 = vmatprep.subr.bf16.mxu0 0
        %278 = vmatpush2.bf16.msra.mxu0 0
        %279 = vmatprep.subr.bf16.mxu0 0
        %280 = vmatpush2.bf16.msra.mxu0 0
        %281 = vmatprep.subr.bf16.mxu0 0
        %282 = vmatpush2.bf16.msra.mxu0 0
        %283 = vmatprep.subr.bf16.mxu0 0
        %284 = vmatpush2.bf16.msra.mxu0 0
        %285 = vmatprep.subr.bf16.mxu0 0
        %286 = vmatpush2.bf16.msra.mxu0 0
        %287 = vmatprep.subr.bf16.mxu0 0
        %288 = vmatpush2.bf16.msra.mxu0 0
        %289 = vmatprep.mubr.bf16.mxu0 0
        %290 = vmatmul.mubr.bf16.gmra.mxu0 %v255
        %v291 = vpop.f32.mrf.mxu0
        %v292 = vadd.f32 %v221, %v291
        %v293 = vpop.f32.mrf.mxu0
        %v294 = vadd.f32 %v221, %v293
        %v295 = vpop.f32.mrf.mxu0
        %v296 = vadd.f32 %v226, %v295
        %v297 = vpop.f32.mrf.mxu0
        %v298 = vadd.f32 %v226, %v297
        %299 = vdwg.mxu0
        %300 = vmatprep.subr.bf16.mxu0 0
        %301 = vmatpush1.bf16.msra.mxu0 0
        %302 = vmatprep.subr.bf16.mxu0 0
        %303 = vmatpush1.bf16.msra.mxu0 0
        %304 = vmatprep.subr.bf16.mxu0 0
        %305 = vmatpush1.bf16.msra.mxu0 0
        %306 = vmatprep.subr.bf16.mxu0 0
        %307 = vmatpush1.bf16.msra.mxu0 0
        %308 = vmatprep.subr.bf16.mxu0 0
        %309 = vmatpush1.bf16.msra.mxu0 0
        %310 = vmatprep.subr.bf16.mxu0 0
        %311 = vmatpush1.bf16.msra.mxu0 0
        %312 = vmatprep.subr.bf16.mxu0 0
        %313 = vmatpush1.bf16.msra.mxu0 0
        %314 = vmatprep.subr.bf16.mxu0 %v248
        %315 = vmatpush1.bf16.msra.mxu0 %v247
        %316 = vmatprep.subr.bf16.mxu0 0
        %317 = vmatpush2.bf16.msra.mxu0 0
        %318 = vmatprep.subr.bf16.mxu0 0
        %319 = vmatpush2.bf16.msra.mxu0 0
        %320 = vmatprep.subr.bf16.mxu0 0
        %321 = vmatpush2.bf16.msra.mxu0 0
        %322 = vmatprep.subr.bf16.mxu0 0
        %323 = vmatpush2.bf16.msra.mxu0 0
        %324 = vmatprep.subr.bf16.mxu0 0
        %325 = vmatpush2.bf16.msra.mxu0 0
        %326 = vmatprep.subr.bf16.mxu0 0
        %327 = vmatpush2.bf16.msra.mxu0 0
        %328 = vmatprep.subr.bf16.mxu0 0
        %329 = vmatpush2.bf16.msra.mxu0 0
        %330 = vmatprep.subr.bf16.mxu0 0
        %331 = vmatpush2.bf16.msra.mxu0 0
        %332 = vmatprep.mubr.bf16.mxu0 0
        %333 = vmatmul.mubr.bf16.gmra.mxu0 %v255
        %v334 = vpop.f32.mrf.mxu0
        %v335 = vadd.f32 %v221, %v334
        %v336 = vpop.f32.mrf.mxu0
        %v337 = vadd.f32 %v221, %v336
        %v338 = vpop.f32.mrf.mxu0
        %v339 = vadd.f32 %v226, %v338
        %v340 = vpop.f32.mrf.mxu0
        %v341 = vadd.f32 %v226, %v340
        %342 = vdwg.mxu0
        %v343 = vmax.f32 %v292, 0.0
        %v344 = vmax.f32 %v294, 0.0
        %v345 = vmax.f32 %v335, 0.0
        %v346 = vmax.f32 %v337, 0.0
        %v347 = vmax.f32 %v296, 0.0
        %v348 = vmax.f32 %v298, 0.0
        %v349 = vmax.f32 %v339, 0.0
        %v350 = vmax.f32 %v341, 0.0
        %351 = vst [vmem:[%s206] sm:$0xff] %v343
        %352 = vst [vmem:[%s206 + $0x8] sm:$0xff] %v344
        %353 = vst [vmem:[%s206 + $0x10] sm:$0xff] %v345
        %354 = vst [vmem:[%s206 + $0x18] sm:$0xff] %v346
        %355 = vst [vmem:[%s206 + $0x20] sm:$0xff] %v347
        %356 = vst [vmem:[%s206 + $0x28] sm:$0xff] %v348
        %357 = vst [vmem:[%s206 + $0x30] sm:$0xff] %v349
        %358 = vst [vmem:[%s206 + $0x38] sm:$0xff] %v350
        %s359 = sand.u32 %s112, 1
        %s360 = scalar_lea.sflag [#allocation4], %s359
        %s361 = sand.u32 %s112, 1
        %s362 = smul.addr %s361, 64
        %s363 = scalar_lea.vmem [#allocation5], %s362
        // Predicated region
        $region37: #{tpu_custom_call.1} parent=31 // pred_check
          %p364 = pneg %p122
        $region38: #{tpu_custom_call.1} parent=31 // pred_check_branch
          %366 = sbr.rel (%p364) target = $region40
        $region39: #{tpu_custom_call.1} parent=31 // pred_region
          %s367 = smul.u32 4, %s25
          %s369 = ssub.s32 1024, 1024
          %370 = vsyncadd %s360, %s369
          %s371 = smul.addr %s24, 8
          %s372 = sadd.s32 %s367, %s371
          %s373 = smul.addr %s372, 128
          %s374 = scalar_lea.hbm %s3, %s373
          %s375 = sshll.u32 %s363, 4
          %s376 = int_to_ptr.vmem [resolvable:$true] %s375
          %381 = dma.vmem_to_hbm [thread:$0]  %s376, 1024, %s374, %s360, 512, 512, 32
        $region40: #{tpu_custom_call.1} parent=31 // pred_fallthru
          _
      $region32: #{tpu_custom_call.1} parent=5 // pred_fallthru
        _
      %p382 = scmp.le.s32.totalorder 2, %s15
      // Predicated region
      $region41: #{tpu_custom_call.1} parent=5 // pred_check
        %p383 = pneg %p382
      $region42: #{tpu_custom_call.1} parent=5 // pred_check_branch
        %385 = sbr.rel (%p383) target = $region44
      $region43: #{tpu_custom_call.1} parent=5 // pred_region
        %s386 = ssub.s32 %s15, 2
        // Predicated region
        $region45: #{tpu_custom_call.1} parent=43 // pred_check
          %p387 = pneg %p128
        $region46: #{tpu_custom_call.1} parent=43 // pred_check_branch
          %389 = sbr.rel (%p387) target = $region48
        $region47: #{tpu_custom_call.1} parent=43 // pred_region
          %s390 = sand.u32 %s113, 1
          %s391 = scalar_lea.sflag [#allocation4], %s390
          %s392 = sand.u32 %s113, 1
          %s393 = smul.addr %s392, 64
          %s394 = scalar_lea.vmem [#allocation5], %s393
          %395 = dma.done %s391, 1024
        $region48: #{tpu_custom_call.1} parent=43 // pred_fallthru
          _
      $region44: #{tpu_custom_call.1} parent=5 // pred_fallthru
        _
    $region6: #{tpu_custom_call.1} parent=1 // loop_footer
      %s19 = sadd.s32 1, %s15
    $region7: #{tpu_custom_call.1} parent=1 // loop_footer_branch
      %14 = sbr.rel target = $region3
    $region8: #{tpu_custom_call.1} parent=1 // loop_exit
      _
    %396 = vsyncpa [#allocation3], 1
    %s397 = scalar_lea.sflag [#allocation3], 1
    %398 = vsyncpa %s397, 1
    %399 = vsyncpa [#allocation4], 1
    %s400 = scalar_lea.sflag [#allocation4], 1
    %401 = vsyncpa %s400, 1

</llo_original>
